<compile_context>
chip_gen: v7x
topology: tpu7x:2x2x1
jax: 0.10.0
libtpu: 0.0.40
codegen_flags: <defaults>
</compile_context>

<pallas_src>
import math
from functools import partial

import numpy as np
import jax
import jax.numpy as jnp
from jax.experimental import pallas as pl
from jax.experimental.pallas import tpu as pltpu


# ------------------------- Pallas kernel --------------------------------------

def _blurpool_kernel(dh_ref, dw_ref, halo_ref, x_ref, o_ref, *, kt, tc_chunk, st, wo):
    # dh_ref:   (Ho, H)          blur + stride-ss downsample along H (pad folded in)
    # dw_ref:   (W, Wo)          same along W (transposed)
    # halo_ref: (C, H, W)        input frame just before this T-chunk (t = st*Tc*tc - 1)
    # x_ref:    (C, st*Tc, H, W) the st*Tc input frames owned by this chunk
    # o_ref:    (Ho, Tc*Wo)      Tc output frames packed along lanes
    f32 = jnp.float32
    dh = dh_ref[...]
    dw = dw_ref[...]

    # Channel sums (groups=1 -> every output channel uses the same sum).
    s = jnp.sum(x_ref[...].astype(f32), axis=0)            # (st*Tc, H, W)
    s_halo = jnp.sum(halo_ref[...].astype(f32), axis=0)    # (H, W)

    # The halo frame is the zero pad frame (t = -1) on the very first chunk:
    # zero-weight it at runtime instead of materializing a padded tensor.
    w_halo = jnp.where(pl.program_id(1) == 0, 0.0, kt[0])

    for j in range(tc_chunk):                               # static, unrolled
        base = st * j
        prev = w_halo * s_halo if j == 0 else kt[0] * s[base - 1]
        z = prev + kt[1] * s[base] + kt[2] * s[base + 1]    # temporal blur, (H, W)
        # Spatial blur + stride-ss downsample on the MXU.
        y = jnp.dot(jnp.dot(dh, z, preferred_element_type=f32), dw,
                    preferred_element_type=f32)             # (Ho, Wo)
        o_ref[:, j * wo:(j + 1) * wo] = y.astype(o_ref.dtype)


# ------------------------- helpers ---------------------------------------------

def _binomial(k):
    v = np.array([math.comb(k - 1, i) for i in range(k)], np.float64)
    return v / v.sum()


def _band_matrix(n_in, n_out, k, stride, pad, taps, transpose=False):
    # Blur + downsample with the zero pad folded in: boundary taps that fall on
    # the (zero) pad are simply dropped — exact.
    m = np.zeros((n_out, n_in), np.float32)
    for o in range(n_out):
        start = o * stride - pad
        for i in range(k):
            r = start + i
            if 0 <= r < n_in:
                m[o, r] = taps[i]
    return m.T if transpose else m


# ------------------------- wrapper ---------------------------------------------

def blur_pooling_3d(x, *, kernel_size=3, time_factor=2, space_factor=2,
                    out_channels=None, num_groups=1):
    """x: (B, C, T, H, W).  Returns (B, O, T', H', W') in x.dtype."""
    # TODO(synk): num_groups > 1 (per-group channel sums) not implemented.
    assert num_groups == 1
    # TODO(synk): only kernel_size=3 (the module default, pad=1 / one leading
    # temporal halo frame) is implemented.
    assert kernel_size == 3
    if isinstance(space_factor, int):
        space_factor = (space_factor, space_factor)

    B, C, T, H, W = x.shape
    O = C if out_channels is None else out_channels
    k = kernel_size
    st = time_factor
    ss_h, ss_w = space_factor
    pad = (k - 1) // 2

    # TODO(synk): odd T / time_factor==1 would need a trailing zero-pad frame.
    assert st >= 2 and T % st == 0

    To = T // st
    Ho = (H + 2 * pad - k) // ss_h + 1
    Wo = (W + 2 * pad - k) // ss_w + 1

    taps = _binomial(k)
    kt = tuple(float(t) for t in taps)                     # baked as immediates
    d_h = jnp.asarray(_band_matrix(H, Ho, k, ss_h, pad, taps))                   # (Ho, H)
    d_w = jnp.asarray(_band_matrix(W, Wo, k, ss_w, pad, taps, transpose=True))   # (W, Wo)

    # Temporal chunk size: largest divisor of To whose main input block
    # (C, st*Tc, H, W) stays under a conservative per-buffer VMEM budget
    # (double-buffered by the pipeline; safe for the v5e 16 MiB / v7x 32 MiB
    # default scoped limits).
    itemsize = jnp.dtype(x.dtype).itemsize
    budget = 2 << 20
    Tc = 1
    for cand in range(1, To + 1):
        if To % cand == 0 and C * st * cand * H * W * itemsize <= budget:
            Tc = cand
    n_tc = To // Tc
    # TODO(synk): for very large frames (single frame slab over budget), tile H
    # with a halo folded into per-tile D_h so one block never exceeds VMEM.

    kernel = partial(_blurpool_kernel, kt=kt, tc_chunk=Tc, st=st, wo=Wo)

    in_specs = [
        pl.BlockSpec((Ho, H), lambda b, tc: (0, 0)),
        pl.BlockSpec((W, Wo), lambda b, tc: (0, 0)),
        # 1-frame temporal halo (frame st*Tc*tc - 1; clamped + zero-weighted on
        # the first chunk where it is the zero pad frame).
        pl.BlockSpec((None, C, None, H, W),
                     lambda b, tc: (b, 0, jnp.maximum(st * Tc * tc - pad, 0), 0, 0)),
        # Main stream: the st*Tc input frames owned by this chunk (each frame
        # read exactly once by this stream -> ~1x HBM reads).
        pl.BlockSpec((None, C, st * Tc, H, W), lambda b, tc: (b, 0, tc, 0, 0)),
    ]

    out = pl.pallas_call(
        kernel,
        out_shape=jax.ShapeDtypeStruct((B, n_tc, Ho, Tc * Wo), x.dtype),
        grid=(B, n_tc),
        in_specs=in_specs,
        out_specs=pl.BlockSpec((None, None, Ho, Tc * Wo),
                               lambda b, tc: (b, tc, 0, 0)),
        compiler_params=pltpu.CompilerParams(
            dimension_semantics=("parallel", "parallel"),
            vmem_limit_bytes=32 * 1024 * 1024),
    )(d_h, d_w, x, x)

    # Un-pack the time chunk from the lane axis (tiny output tensor), then
    # broadcast the identical blurred channel over the out_channels axis in XLA.
    y = out.reshape(B, n_tc, Ho, Tc, Wo)
    y = jnp.transpose(y, (0, 1, 3, 2, 4)).reshape(B, To, Ho, Wo)
    return jnp.broadcast_to(y[:, None], (B, O, To, Ho, Wo))


# ------------------------- driver ----------------------------------------------

if __name__ == "__main__":
    key = jax.random.PRNGKey(0)
    B, C, T, H, W = 2, 4, 8, 16, 16
    x = jax.random.normal(key, (B, C, T, H, W), jnp.float32)   # NCTHW like PyTorch

    fn = jax.jit(partial(blur_pooling_3d, kernel_size=3,
                         time_factor=2, space_factor=2))
    out = jax.block_until_ready(fn(x))
    assert out.shape == (B, C, T // 2, H // 2, W // 2)

    # Exact float64 numpy reference of the PyTorch conv3d with the repeated blur.
    kk = 3
    taps = _binomial(kk)
    blur3d = taps[:, None, None] * taps[None, :, None] * taps[None, None, :]
    xn = np.asarray(x, np.float64)
    xpad = np.pad(xn, ((0, 0), (0, 0), (1, 1), (1, 1), (1, 1)))
    To, Ho, Wo = out.shape[2:]
    ref1 = np.zeros((B, 1, To, Ho, Wo))
    for i in range(kk):
        for j in range(kk):
            for l in range(kk):
                win = xpad[:, :, i:i + 2 * To:2, j:j + 2 * Ho:2, l:l + 2 * Wo:2]
                ref1 += blur3d[i, j, l] * win.sum(axis=1, keepdims=True)
    ref = np.broadcast_to(ref1, (B, C, To, Ho, Wo))

    np.testing.assert_allclose(np.asarray(out), ref, rtol=1e-2, atol=1e-2)
    print("KERNEL_OK")
</pallas_src>

<mosaic_0001>
module attributes {stable_mosaic.version = 11 : i64} {
  func.func @_blurpool_kernel(%arg0: i32, %arg1: i32, %arg2: memref<8x16xf32, #tpu.memory_space<vmem>>, %arg3: memref<16x8xf32, #tpu.memory_space<vmem>>, %arg4: memref<1x4x1x16x16xf32, #tpu.memory_space<vmem>>, %arg5: memref<1x4x8x16x16xf32, #tpu.memory_space<vmem>>, %arg6: memref<1x1x8x32xf32, #tpu.memory_space<vmem>>) attributes {dimension_semantics = [#tpu.dimension_semantics<parallel>, #tpu.dimension_semantics<parallel>], iteration_bounds = array<i64: 2, 1>, scalar_prefetch = 0 : i64, scratch_operands = 0 : i64, tpu.core_type = #tpu.core_type<tc>, window_params = [{pipeline_mode = #tpu.pipeline_mode<synchronous>, transform_indices = @transform_0, window_bounds = array<i64: 8, 16>}, {pipeline_mode = #tpu.pipeline_mode<synchronous>, transform_indices = @transform_1, window_bounds = array<i64: 16, 8>}, {transform_indices = @transform_2, window_bounds = array<i64: 1, 4, 1, 16, 16>}, {transform_indices = @transform_3, window_bounds = array<i64: 1, 4, 8, 16, 16>}, {transform_indices = @transform_4, window_bounds = array<i64: 1, 1, 8, 32>}]} {
    %c0 = arith.constant 0 : index
    %c0_0 = arith.constant 0 : index
    %0 = vector.load %arg2[%c0, %c0_0] : memref<8x16xf32, #tpu.memory_space<vmem>>, vector<8x16xf32>
    %c0_1 = arith.constant 0 : index
    %c0_2 = arith.constant 0 : index
    %1 = vector.load %arg3[%c0_1, %c0_2] : memref<16x8xf32, #tpu.memory_space<vmem>>, vector<16x8xf32>
    %c0_3 = arith.constant 0 : index
    %c0_4 = arith.constant 0 : index
    %c0_5 = arith.constant 0 : index
    %c0_6 = arith.constant 0 : index
    %c0_7 = arith.constant 0 : index
    %2 = vector.load %arg5[%c0_3, %c0_4, %c0_5, %c0_6, %c0_7] : memref<1x4x8x16x16xf32, #tpu.memory_space<vmem>>, vector<1x4x8x16x16xf32>
    %3 = vector.shape_cast %2 : vector<1x4x8x16x16xf32> to vector<4x8x16x16xf32>
    %cst = arith.constant dense<0.000000e+00> : vector<8x16x16xf32>
    %4 = vector.multi_reduction <add>, %3, %cst [0] : vector<4x8x16x16xf32> to vector<8x16x16xf32>
    %c0_8 = arith.constant 0 : index
    %c0_9 = arith.constant 0 : index
    %c0_10 = arith.constant 0 : index
    %c0_11 = arith.constant 0 : index
    %c0_12 = arith.constant 0 : index
    %5 = vector.load %arg4[%c0_8, %c0_9, %c0_10, %c0_11, %c0_12] : memref<1x4x1x16x16xf32, #tpu.memory_space<vmem>>, vector<1x4x1x16x16xf32>
    %6 = vector.shape_cast %5 : vector<1x4x1x16x16xf32> to vector<4x16x16xf32>
    %cst_13 = arith.constant dense<0.000000e+00> : vector<16x16xf32>
    %7 = vector.multi_reduction <add>, %6, %cst_13 [0] : vector<4x16x16xf32> to vector<16x16xf32>
    %c0_i32 = arith.constant 0 : i32
    %8 = arith.cmpi eq, %arg1, %c0_i32 : i32
    %cst_14 = arith.constant 0.000000e+00 : f32
    %cst_15 = arith.constant 2.500000e-01 : f32
    %9 = arith.select %8, %cst_14, %cst_15 : f32
    %10 = vector.broadcast %9 : f32 to vector<16x16xf32>
    %11 = arith.mulf %10, %7 : vector<16x16xf32>
    %12 = vector.extract_strided_slice %4 {offsets = [0, 0, 0], sizes = [1, 16, 16], strides = [1, 1, 1]} : vector<8x16x16xf32> to vector<1x16x16xf32>
    %13 = vector.shape_cast %12 : vector<1x16x16xf32> to vector<16x16xf32>
    %cst_16 = arith.constant 5.000000e-01 : f32
    %14 = vector.broadcast %cst_16 : f32 to vector<16x16xf32>
    %15 = arith.mulf %14, %13 : vector<16x16xf32>
    %16 = arith.addf %11, %15 : vector<16x16xf32>
    %17 = vector.extract_strided_slice %4 {offsets = [1, 0, 0], sizes = [1, 16, 16], strides = [1, 1, 1]} : vector<8x16x16xf32> to vector<1x16x16xf32>
    %18 = vector.shape_cast %17 : vector<1x16x16xf32> to vector<16x16xf32>
    %cst_17 = arith.constant 2.500000e-01 : f32
    %19 = vector.broadcast %cst_17 : f32 to vector<16x16xf32>
    %20 = arith.mulf %19, %18 : vector<16x16xf32>
    %21 = arith.addf %16, %20 : vector<16x16xf32>
    %cst_18 = arith.constant dense<0.000000e+00> : vector<8x16xf32>
    %22 = tpu.matmul %0, %21, %cst_18 {dimension_numbers = #tpu.dot_dimension_numbers<[1], [0], [0], [1], [0, 0, 1, 1], [], []>} : vector<8x16xf32>, vector<16x16xf32>, vector<8x16xf32> -> vector<8x16xf32>
    %cst_19 = arith.constant dense<0.000000e+00> : vector<8x8xf32>
    %23 = tpu.matmul %22, %1, %cst_19 {dimension_numbers = #tpu.dot_dimension_numbers<[1], [0], [0], [1], [0, 0, 1, 1], [], []>} : vector<8x16xf32>, vector<16x8xf32>, vector<8x8xf32> -> vector<8x8xf32>
    %c0_20 = arith.constant 0 : index
    %c0_21 = arith.constant 0 : index
    %c0_22 = arith.constant 0 : index
    %c0_23 = arith.constant 0 : index
    %24 = vector.load %arg6[%c0_20, %c0_21, %c0_22, %c0_23] : memref<1x1x8x32xf32, #tpu.memory_space<vmem>>, vector<1x1x8x8xf32>
    %25 = vector.shape_cast %24 : vector<1x1x8x8xf32> to vector<8x8xf32>
    %26 = vector.shape_cast %23 : vector<8x8xf32> to vector<1x1x8x8xf32>
    tpu.vector_store %arg6[%c0_20, %c0_21, %c0_22, %c0_23], %26 {strides = array<i32>} : memref<1x1x8x32xf32, #tpu.memory_space<vmem>>, vector<1x1x8x8xf32>,
    %27 = vector.extract_strided_slice %4 {offsets = [1, 0, 0], sizes = [1, 16, 16], strides = [1, 1, 1]} : vector<8x16x16xf32> to vector<1x16x16xf32>
    %28 = vector.shape_cast %27 : vector<1x16x16xf32> to vector<16x16xf32>
    %cst_24 = arith.constant 2.500000e-01 : f32
    %29 = vector.broadcast %cst_24 : f32 to vector<16x16xf32>
    %30 = arith.mulf %29, %28 : vector<16x16xf32>
    %31 = vector.extract_strided_slice %4 {offsets = [2, 0, 0], sizes = [1, 16, 16], strides = [1, 1, 1]} : vector<8x16x16xf32> to vector<1x16x16xf32>
    %32 = vector.shape_cast %31 : vector<1x16x16xf32> to vector<16x16xf32>
    %cst_25 = arith.constant 5.000000e-01 : f32
    %33 = vector.broadcast %cst_25 : f32 to vector<16x16xf32>
    %34 = arith.mulf %33, %32 : vector<16x16xf32>
    %35 = arith.addf %30, %34 : vector<16x16xf32>
    %36 = vector.extract_strided_slice %4 {offsets = [3, 0, 0], sizes = [1, 16, 16], strides = [1, 1, 1]} : vector<8x16x16xf32> to vector<1x16x16xf32>
    %37 = vector.shape_cast %36 : vector<1x16x16xf32> to vector<16x16xf32>
    %cst_26 = arith.constant 2.500000e-01 : f32
    %38 = vector.broadcast %cst_26 : f32 to vector<16x16xf32>
    %39 = arith.mulf %38, %37 : vector<16x16xf32>
    %40 = arith.addf %35, %39 : vector<16x16xf32>
    %cst_27 = arith.constant dense<0.000000e+00> : vector<8x16xf32>
    %41 = tpu.matmul %0, %40, %cst_27 {dimension_numbers = #tpu.dot_dimension_numbers<[1], [0], [0], [1], [0, 0, 1, 1], [], []>} : vector<8x16xf32>, vector<16x16xf32>, vector<8x16xf32> -> vector<8x16xf32>
    %cst_28 = arith.constant dense<0.000000e+00> : vector<8x8xf32>
    %42 = tpu.matmul %41, %1, %cst_28 {dimension_numbers = #tpu.dot_dimension_numbers<[1], [0], [0], [1], [0, 0, 1, 1], [], []>} : vector<8x16xf32>, vector<16x8xf32>, vector<8x8xf32> -> vector<8x8xf32>
    %c0_29 = arith.constant 0 : index
    %c0_30 = arith.constant 0 : index
    %c0_31 = arith.constant 0 : index
    %c8 = arith.constant 8 : index
    %43 = vector.load %arg6[%c0_29, %c0_30, %c0_31, %c8] : memref<1x1x8x32xf32, #tpu.memory_space<vmem>>, vector<1x1x8x8xf32>
    %44 = vector.shape_cast %43 : vector<1x1x8x8xf32> to vector<8x8xf32>
    %45 = vector.shape_cast %42 : vector<8x8xf32> to vector<1x1x8x8xf32>
    tpu.vector_store %arg6[%c0_29, %c0_30, %c0_31, %c8], %45 {strides = array<i32>} : memref<1x1x8x32xf32, #tpu.memory_space<vmem>>, vector<1x1x8x8xf32>,
    %46 = vector.extract_strided_slice %4 {offsets = [3, 0, 0], sizes = [1, 16, 16], strides = [1, 1, 1]} : vector<8x16x16xf32> to vector<1x16x16xf32>
    %47 = vector.shape_cast %46 : vector<1x16x16xf32> to vector<16x16xf32>
    %cst_32 = arith.constant 2.500000e-01 : f32
    %48 = vector.broadcast %cst_32 : f32 to vector<16x16xf32>
    %49 = arith.mulf %48, %47 : vector<16x16xf32>
    %50 = vector.extract_strided_slice %4 {offsets = [4, 0, 0], sizes = [1, 16, 16], strides = [1, 1, 1]} : vector<8x16x16xf32> to vector<1x16x16xf32>
    %51 = vector.shape_cast %50 : vector<1x16x16xf32> to vector<16x16xf32>
    %cst_33 = arith.constant 5.000000e-01 : f32
    %52 = vector.broadcast %cst_33 : f32 to vector<16x16xf32>
    %53 = arith.mulf %52, %51 : vector<16x16xf32>
    %54 = arith.addf %49, %53 : vector<16x16xf32>
    %55 = vector.extract_strided_slice %4 {offsets = [5, 0, 0], sizes = [1, 16, 16], strides = [1, 1, 1]} : vector<8x16x16xf32> to vector<1x16x16xf32>
    %56 = vector.shape_cast %55 : vector<1x16x16xf32> to vector<16x16xf32>
    %cst_34 = arith.constant 2.500000e-01 : f32
    %57 = vector.broadcast %cst_34 : f32 to vector<16x16xf32>
    %58 = arith.mulf %57, %56 : vector<16x16xf32>
    %59 = arith.addf %54, %58 : vector<16x16xf32>
    %cst_35 = arith.constant dense<0.000000e+00> : vector<8x16xf32>
    %60 = tpu.matmul %0, %59, %cst_35 {dimension_numbers = #tpu.dot_dimension_numbers<[1], [0], [0], [1], [0, 0, 1, 1], [], []>} : vector<8x16xf32>, vector<16x16xf32>, vector<8x16xf32> -> vector<8x16xf32>
    %cst_36 = arith.constant dense<0.000000e+00> : vector<8x8xf32>
    %61 = tpu.matmul %60, %1, %cst_36 {dimension_numbers = #tpu.dot_dimension_numbers<[1], [0], [0], [1], [0, 0, 1, 1], [], []>} : vector<8x16xf32>, vector<16x8xf32>, vector<8x8xf32> -> vector<8x8xf32>
    %c0_37 = arith.constant 0 : index
    %c0_38 = arith.constant 0 : index
    %c0_39 = arith.constant 0 : index
    %c16 = arith.constant 16 : index
    %62 = vector.load %arg6[%c0_37, %c0_38, %c0_39, %c16] : memref<1x1x8x32xf32, #tpu.memory_space<vmem>>, vector<1x1x8x8xf32>
    %63 = vector.shape_cast %62 : vector<1x1x8x8xf32> to vector<8x8xf32>
    %64 = vector.shape_cast %61 : vector<8x8xf32> to vector<1x1x8x8xf32>
    tpu.vector_store %arg6[%c0_37, %c0_38, %c0_39, %c16], %64 {strides = array<i32>} : memref<1x1x8x32xf32, #tpu.memory_space<vmem>>, vector<1x1x8x8xf32>,
    %65 = vector.extract_strided_slice %4 {offsets = [5, 0, 0], sizes = [1, 16, 16], strides = [1, 1, 1]} : vector<8x16x16xf32> to vector<1x16x16xf32>
    %66 = vector.shape_cast %65 : vector<1x16x16xf32> to vector<16x16xf32>
    %cst_40 = arith.constant 2.500000e-01 : f32
    %67 = vector.broadcast %cst_40 : f32 to vector<16x16xf32>
    %68 = arith.mulf %67, %66 : vector<16x16xf32>
    %69 = vector.extract_strided_slice %4 {offsets = [6, 0, 0], sizes = [1, 16, 16], strides = [1, 1, 1]} : vector<8x16x16xf32> to vector<1x16x16xf32>
    %70 = vector.shape_cast %69 : vector<1x16x16xf32> to vector<16x16xf32>
    %cst_41 = arith.constant 5.000000e-01 : f32
    %71 = vector.broadcast %cst_41 : f32 to vector<16x16xf32>
    %72 = arith.mulf %71, %70 : vector<16x16xf32>
    %73 = arith.addf %68, %72 : vector<16x16xf32>
    %74 = vector.extract_strided_slice %4 {offsets = [7, 0, 0], sizes = [1, 16, 16], strides = [1, 1, 1]} : vector<8x16x16xf32> to vector<1x16x16xf32>
    %75 = vector.shape_cast %74 : vector<1x16x16xf32> to vector<16x16xf32>
    %cst_42 = arith.constant 2.500000e-01 : f32
    %76 = vector.broadcast %cst_42 : f32 to vector<16x16xf32>
    %77 = arith.mulf %76, %75 : vector<16x16xf32>
    %78 = arith.addf %73, %77 : vector<16x16xf32>
    %cst_43 = arith.constant dense<0.000000e+00> : vector<8x16xf32>
    %79 = tpu.matmul %0, %78, %cst_43 {dimension_numbers = #tpu.dot_dimension_numbers<[1], [0], [0], [1], [0, 0, 1, 1], [], []>} : vector<8x16xf32>, vector<16x16xf32>, vector<8x16xf32> -> vector<8x16xf32>
    %cst_44 = arith.constant dense<0.000000e+00> : vector<8x8xf32>
    %80 = tpu.matmul %79, %1, %cst_44 {dimension_numbers = #tpu.dot_dimension_numbers<[1], [0], [0], [1], [0, 0, 1, 1], [], []>} : vector<8x16xf32>, vector<16x8xf32>, vector<8x8xf32> -> vector<8x8xf32>
    %c0_45 = arith.constant 0 : index
    %c0_46 = arith.constant 0 : index
    %c0_47 = arith.constant 0 : index
    %c24 = arith.constant 24 : index
    %81 = vector.load %arg6[%c0_45, %c0_46, %c0_47, %c24] : memref<1x1x8x32xf32, #tpu.memory_space<vmem>>, vector<1x1x8x8xf32>
    %82 = vector.shape_cast %81 : vector<1x1x8x8xf32> to vector<8x8xf32>
    %83 = vector.shape_cast %80 : vector<8x8xf32> to vector<1x1x8x8xf32>
    tpu.vector_store %arg6[%c0_45, %c0_46, %c0_47, %c24], %83 {strides = array<i32>} : memref<1x1x8x32xf32, #tpu.memory_space<vmem>>, vector<1x1x8x8xf32>,
    return
  }
  func.func @transform_0(%arg0: i32, %arg1: i32) -> (i32, i32) {
    %c0_i32 = arith.constant 0 : i32
    %c0_i32_0 = arith.constant 0 : i32
    %c0_i32_1 = arith.constant 0 : i32
    return %c0_i32, %c0_i32_0 : i32, i32
  }
  func.func @transform_1(%arg0: i32, %arg1: i32) -> (i32, i32) {
    %c0_i32 = arith.constant 0 : i32
    %c0_i32_0 = arith.constant 0 : i32
    %c0_i32_1 = arith.constant 0 : i32
    return %c0_i32, %c0_i32_0 : i32, i32
  }
  func.func @transform_2(%arg0: i32, %arg1: i32) -> (i32, i32, i32, i32, i32) {
    %c8_i32 = arith.constant 8 : i32
    %0 = arith.muli %c8_i32, %arg1 : i32
    %c1_i32 = arith.constant 1 : i32
    %1 = arith.subi %0, %c1_i32 : i32
    %c0_i32 = arith.constant 0 : i32
    %2 = arith.maxsi %1, %c0_i32 : i32
    %c0_i32_0 = arith.constant 0 : i32
    %c0_i32_1 = arith.constant 0 : i32
    %c0_i32_2 = arith.constant 0 : i32
    %c0_i32_3 = arith.constant 0 : i32
    return %arg0, %c0_i32_0, %2, %c0_i32_1, %c0_i32_2 : i32, i32, i32, i32, i32
  }
  func.func @transform_3(%arg0: i32, %arg1: i32) -> (i32, i32, i32, i32, i32) {
    %c0_i32 = arith.constant 0 : i32
    %c0_i32_0 = arith.constant 0 : i32
    %c0_i32_1 = arith.constant 0 : i32
    %c0_i32_2 = arith.constant 0 : i32
    return %arg0, %c0_i32, %arg1, %c0_i32_0, %c0_i32_1 : i32, i32, i32, i32, i32
  }
  func.func @transform_4(%arg0: i32, %arg1: i32) -> (i32, i32, i32, i32) {
    %c0_i32 = arith.constant 0 : i32
    %c0_i32_0 = arith.constant 0 : i32
    %c0_i32_1 = arith.constant 0 : i32
    return %arg0, %arg1, %c0_i32, %c0_i32_0 : i32, i32, i32, i32
  }
}

</mosaic_0001>

<llo_original>
// kernel: blur_pooling_3d.1
$region0: #{blur_pooling_3d.1}
  #allocation0 [shape = 'u32[]', space=smem, size = 0x4, offset = 0x4, fixed_abs, tag = 'smem constant byte address 0x4 - core index']
  #allocation1 [shape = 'u32[144,128]{1,0:T(1,128)}', space=vmem, size = 0x12000, scoped, tag = 'internal scratch']
  #allocation8 [shape = 's32[]', space=sflag, size = 0x4, offset = 0, fixed_abs, tag = 'sflag constant byte address 0x0 - dummy sync flag']
  %s0 = inlined_call_operand.hbm [shape: f32[8,16], index: 0, kind: input, shape index: {}]
  %s1 = inlined_call_operand.hbm [shape: f32[16,8], index: 1, kind: input, shape index: {}]
  %s2 = inlined_call_operand.hbm [shape: f32[2,4,8,16,16], index: 2, kind: input, shape index: {}, may-alias: {2,3}]
  %s3 = inlined_call_operand.hbm [shape: f32[2,4,8,16,16], index: 3, kind: input, shape index: {}, may-alias: {2,3}]
  %s4 = inlined_call_operand.vmem [shape: f32[2,1,8,32], index: 4, kind: output, shape index: {}]
  %s5 = sld [smem:[#allocation0]]
  $region65: #{blur_pooling_3d.1} parent=0
    _
  %s7 = ssub.s32 1, %s5
  %s8 = scalar_select 0, %s7, %s5
  $region1: #{blur_pooling_3d.1} parent=0
    #allocation2 [shape = 'u8[4096]{0}', space=vmem, size = 0x1000, scoped, tag = 'input window, operand 0, single buffered']
    #allocation3 [shape = 's32[2]{0}', space=sflag, size = 0x8, scoped, tag = 'scoped memory for blur_pooling_3d.1']
    #allocation4 [shape = 'u8[8192]{0}', space=vmem, size = 0x2000, scoped, tag = 'input window, operand 1, single buffered']
    #allocation5 [shape = 's32[1]{0}', space=sflag, size = 0x4, scoped, tag = 'scoped memory for blur_pooling_3d.1']
    #allocation6 [shape = 'u8[65536]{0}', space=vmem, size = 0x10000, scoped, tag = 'input window, operand 2']
    #allocation7 [shape = 'u8[524288]{0}', space=vmem, size = 0x80000, scoped, tag = 'input window, operand 3']
    %9 = vsyncpa [#allocation3], 0
    %10 = vsyncpa [#allocation5], 0
    loop: start=0, step=1, limit=4
    $region2: #{blur_pooling_3d.1} parent=1 // loop_pre_header
      _
    $region3: #{blur_pooling_3d.1} parent=1 // loop_header
      %s12 = sphi 0, %s16
      %p13 = scmp.ge.s32.totalorder %s12, 4
      %s19 = sphi 0, %s31
      %s20 = sphi 0, %s27
      %s21 = sphi 0, %s19
      %s22 = sphi 0, %s20
      %s23 = sphi 0, %s21
      %s24 = sphi 0, %s22
      %s32 = sphi 0, %s32
      %s34 = sphi 0, %s32
      %s35 = sphi 0, %s34
      %s49 = sphi 0, %s35
      %s53 = sphi 0, %s53
      %s55 = sphi 0, %s53
      %s56 = sphi 0, %s55
      %s70 = sphi 0, %s56
      %s86 = sphi 0, %s88
      %s89 = sphi 0, %s86
      %s90 = sphi 0, %s89
      %s106 = sphi 0, %s90
      %s114 = sphi 0, %s116
      %s117 = sphi 0, %s114
      %s118 = sphi 0, %s117
      %s134 = sphi 0, %s118
      %s142 = sphi 0, %s144
      %s145 = sphi 0, %s142
      %s146 = sphi 0, %s145
      %s162 = sphi 0, %s146
    $region4: #{blur_pooling_3d.1} parent=1 // loop_header_branch
      %15 = sbr.rel (%p13) target = $region8
    $region5: #{blur_pooling_3d.1} parent=1 // loop_body
      %s17 = ssub.s32 %s12, 1
      %s18 = ssub.s32 %s12, 2
      %s25 = sadd.s32 1, %s20
      %p26 = scmp.ge.s32.totalorder %s25, 1
      %s27 = scalar_select %p26, 0, %s25
      %s28 = sadd.s32 1, %s19
      %s29 = scalar_select %p26, %s28, %s19
      %p30 = scmp.ge.s32.totalorder %s29, 2
      %s31 = scalar_select %p30, 0, %s29
      %s33 = sadd.s32 %s32, 1
      %p36 = scmp.eq.s32.totalorder %s12, 1
      %p37 = scmp.ne.s32.totalorder %s32, %s34
      %p38 = scmp.eq.s32.totalorder %s12, 0
      %p39 = por %p37, %p38
      %p40 = scmp.ne.s32.totalorder %s32, %s34
      %p41 = scmp.eq.s32.totalorder %s17, 1
      %p42 = por %p40, %p41
      %p43 = scmp.ne.s32.totalorder %s34, %s35
      %p44 = scmp.eq.s32.totalorder %s17, 0
      %p45 = por %p43, %p44
      %p46 = scmp.ne.s32.totalorder %s34, %s35
      %p47 = scmp.eq.s32.totalorder %s18, 1
      %p48 = por %p46, %p47
      %p50 = scmp.ne.s32.totalorder %s35, %s49
      %p51 = scmp.eq.s32.totalorder %s18, 0
      %p52 = por %p50, %p51
      %s54 = sadd.s32 %s53, 1
      %p57 = scmp.eq.s32.totalorder %s12, 1
      %p58 = scmp.ne.s32.totalorder %s53, %s55
      %p59 = scmp.eq.s32.totalorder %s12, 0
      %p60 = por %p58, %p59
      %p61 = scmp.ne.s32.totalorder %s53, %s55
      %p62 = scmp.eq.s32.totalorder %s17, 1
      %p63 = por %p61, %p62
      %p64 = scmp.ne.s32.totalorder %s55, %s56
      %p65 = scmp.eq.s32.totalorder %s17, 0
      %p66 = por %p64, %p65
      %p67 = scmp.ne.s32.totalorder %s55, %s56
      %p68 = scmp.eq.s32.totalorder %s18, 1
      %p69 = por %p67, %p68
      %p71 = scmp.ne.s32.totalorder %s56, %s70
      %p72 = scmp.eq.s32.totalorder %s18, 0
      %p73 = por %p71, %p72
      %s74 = smul.u32 %s20, 8
      %s75 = ssub.s32 %s74, 1
      %p76 = scmp.gt.s32.totalorder %s75, 0
      %s77 = scalar_select %p76, %s75, 0
      %s78 = smul.u32 %s27, 8
      %s79 = ssub.s32 %s78, 1
      %p80 = scmp.gt.s32.totalorder %s79, 0
      %s81 = scalar_select %p80, %s79, 0
      %s82 = ssub.s32 %s19, %s31
      %s83 = ssub.s32 %s77, %s81
      %s84 = sor.u32 %s82, %s83
      %p85 = scmp.eq.s32.totalorder %s84, 0
      %s87 = sadd.s32 %s86, 1
      %s88 = scalar_select %p85, %s86, %s87
      %p91 = pneg %p85
      %p92 = scmp.eq.s32.totalorder %s12, 1
      %p93 = por %p91, %p92
      %p94 = scmp.ne.s32.totalorder %s86, %s89
      %p95 = scmp.eq.s32.totalorder %s12, 0
      %p96 = por %p94, %p95
      %p97 = scmp.ne.s32.totalorder %s86, %s89
      %p98 = scmp.eq.s32.totalorder %s17, 1
      %p99 = por %p97, %p98
      %p100 = scmp.ne.s32.totalorder %s89, %s90
      %p101 = scmp.eq.s32.totalorder %s17, 0
      %p102 = por %p100, %p101
      %p103 = scmp.ne.s32.totalorder %s89, %s90
      %p104 = scmp.eq.s32.totalorder %s18, 1
      %p105 = por %p103, %p104
      %p107 = scmp.ne.s32.totalorder %s90, %s106
      %p108 = scmp.eq.s32.totalorder %s18, 0
      %p109 = por %p107, %p108
      %s110 = ssub.s32 %s19, %s31
      %s111 = ssub.s32 %s20, %s27
      %s112 = sor.u32 %s110, %s111
      %p113 = scmp.eq.s32.totalorder %s112, 0
      %s115 = sadd.s32 %s114, 1
      %s116 = scalar_select %p113, %s114, %s115
      %p119 = pneg %p113
      %p120 = scmp.eq.s32.totalorder %s12, 1
      %p121 = por %p119, %p120
      %p122 = scmp.ne.s32.totalorder %s114, %s117
      %p123 = scmp.eq.s32.totalorder %s12, 0
      %p124 = por %p122, %p123
      %p125 = scmp.ne.s32.totalorder %s114, %s117
      %p126 = scmp.eq.s32.totalorder %s17, 1
      %p127 = por %p125, %p126
      %p128 = scmp.ne.s32.totalorder %s117, %s118
      %p129 = scmp.eq.s32.totalorder %s17, 0
      %p130 = por %p128, %p129
      %p131 = scmp.ne.s32.totalorder %s117, %s118
      %p132 = scmp.eq.s32.totalorder %s18, 1
      %p133 = por %p131, %p132
      %p135 = scmp.ne.s32.totalorder %s118, %s134
      %p136 = scmp.eq.s32.totalorder %s18, 0
      %p137 = por %p135, %p136
      %s138 = ssub.s32 %s19, %s31
      %s139 = ssub.s32 %s20, %s27
      %s140 = sor.u32 %s138, %s139
      %p141 = scmp.eq.s32.totalorder %s140, 0
      %s143 = sadd.s32 %s142, 1
      %s144 = scalar_select %p141, %s142, %s143
      %p147 = pneg %p141
      %p148 = scmp.eq.s32.totalorder %s12, 1
      %p149 = por %p147, %p148
      %p150 = scmp.ne.s32.totalorder %s142, %s145
      %p151 = scmp.eq.s32.totalorder %s12, 0
      %p152 = por %p150, %p151
      %p153 = scmp.ne.s32.totalorder %s142, %s145
      %p154 = scmp.eq.s32.totalorder %s17, 1
      %p155 = por %p153, %p154
      %p156 = scmp.ne.s32.totalorder %s145, %s146
      %p157 = scmp.eq.s32.totalorder %s17, 0
      %p158 = por %p156, %p157
      %p159 = scmp.ne.s32.totalorder %s145, %s146
      %p160 = scmp.eq.s32.totalorder %s18, 1
      %p161 = por %p159, %p160
      %p163 = scmp.ne.s32.totalorder %s146, %s162
      %p164 = scmp.eq.s32.totalorder %s18, 0
      %p165 = por %p163, %p164
      %p166 = scmp.le.s32.totalorder 1, %s12
      %p167 = scmp.lt.s32.totalorder %s12, 3
      %p168 = pnand %p166, %p167
      %p169 = pneg %p168
      // Predicated region
      $region9: #{blur_pooling_3d.1} parent=5 // pred_check
        _
      $region10: #{blur_pooling_3d.1} parent=5 // pred_check_branch
        %171 = sbr.rel (%p168) target = $region12
      $region11: #{blur_pooling_3d.1} parent=5 // pred_region
        %s172 = ssub.s32 %s12, 1
        // Predicated region
        $region13: #{blur_pooling_3d.1} parent=11 // pred_check
          %p173 = pneg %p45
        $region14: #{blur_pooling_3d.1} parent=11 // pred_check_branch
          %175 = sbr.rel (%p173) target = $region16
        $region15: #{blur_pooling_3d.1} parent=11 // pred_region
          %s177 = ssub.s32 128, 128
          %178 = vsyncadd [#allocation3], %s177
          %s180 = sshll.u32 [#allocation2], 4
          %s181 = int_to_ptr.vmem [resolvable:$true] %s180
          %183 = dma.hbm_to_vmem [thread:$0]  %s0, 128, %s181, [#allocation3]
        $region16: #{blur_pooling_3d.1} parent=11 // pred_fallthru
          _
        // Predicated region
        $region17: #{blur_pooling_3d.1} parent=11 // pred_check
          %p184 = pneg %p66
        $region18: #{blur_pooling_3d.1} parent=11 // pred_check_branch
          %186 = sbr.rel (%p184) target = $region20
        $region19: #{blur_pooling_3d.1} parent=11 // pred_region
          %s188 = ssub.s32 256, 256
          %189 = vsyncadd [#allocation5], %s188
          %s190 = sshll.u32 [#allocation4], 4
          %s191 = int_to_ptr.vmem [resolvable:$true] %s190
          %196 = dma.hbm_to_vmem [thread:$0]  %s1, 256, %s191, [#allocation5], 128, 128, 8
        $region20: #{blur_pooling_3d.1} parent=11 // pred_fallthru
          _
      $region12: #{blur_pooling_3d.1} parent=5 // pred_fallthru
        _
      %p197 = scmp.lt.s32.totalorder %s12, 2
      // Predicated region
      $region21: #{blur_pooling_3d.1} parent=5 // pred_check
        %p198 = pneg %p197
      $region22: #{blur_pooling_3d.1} parent=5 // pred_check_branch
        %200 = sbr.rel (%p198) target = $region24
      $region23: #{blur_pooling_3d.1} parent=5 // pred_region
        // Predicated region
        $region25: #{blur_pooling_3d.1} parent=23 // pred_check
          %p201 = pneg %p96
        $region26: #{blur_pooling_3d.1} parent=23 // pred_check_branch
          %203 = sbr.rel (%p201) target = $region28
        $region27: #{blur_pooling_3d.1} parent=23 // pred_region
          #allocation9 [shape = 'u32[6]{0}', space=smem, size = 0x18, scoped, tag = 'DMA stride descriptor']
          %s204 = sand.u32 %s12, 1
          %s205 = scalar_lea.sflag [#allocation3], %s204
          %s206 = sand.u32 %s86, 1
          %s207 = smul.addr %s206, 64
          %s208 = scalar_lea.vmem [#allocation6], %s207
          %s209 = smul.u32 %s20, 8
          %s210 = ssub.s32 %s209, 1
          %p211 = scmp.gt.s32.totalorder %s210, 0
          %s212 = scalar_select %p211, %s210, 0
          %s214 = ssub.s32 1024, 1024
          %215 = vsyncadd %s205, %s214
          %s216 = smul.addr %s212, 2
          %s217 = smul.addr %s19, 64
          %s218 = sadd.s32 %s216, %s217
          %s219 = smul.addr %s218, 128
          %s220 = scalar_lea.hbm %s2, %s219
          %s222 = sshll.u32 1, 14
          %s223 = sxor.u32 4294967295, %s222
          %s225 = sld [smem:[#allocation0]]
          %s226 = sadd.s32 2, %s225
          %s228 = sshll.u32 7, 26
          %s229 = sxor.u32 4294967295, %s228
          %s230 = sand.u32 0, %s229
          %s231 = sshll.u32 %s226, 26
          %s232 = sor.u32 %s230, %s231
          %s233 = sshll.u32 %s208, 4
          %s234 = int_to_ptr.vmem [resolvable:$true] %s233
          %240 = sst [smem:[#allocation9]] 2048
          %s241 = scalar_lea.smem [#allocation9], 1
          %242 = sst [smem:[%s241]] 256
          %s243 = scalar_lea.smem [#allocation9], 2
          %244 = sst [smem:[%s243]] 2
          %s245 = scalar_lea.smem [#allocation9], 3
          %246 = sst [smem:[%s245]] 128
          %s247 = scalar_lea.smem [#allocation9], 4
          %248 = sst [smem:[%s247]] 128
          %s249 = scalar_lea.smem [#allocation9], 5
          %250 = sst [smem:[%s249]] 8
          %252 = dma.general %s220, 1024, %s234, %s205, [#allocation8], [#allocation9], %s232, 0
        $region28: #{blur_pooling_3d.1} parent=23 // pred_fallthru
          _
        // Predicated region
        $region29: #{blur_pooling_3d.1} parent=23 // pred_check
          %p253 = pneg %p124
        $region30: #{blur_pooling_3d.1} parent=23 // pred_check_branch
          %255 = sbr.rel (%p253) target = $region32
        $region31: #{blur_pooling_3d.1} parent=23 // pred_region
          %s256 = sand.u32 %s12, 1
          %s257 = scalar_lea.sflag [#allocation3], %s256
          %s258 = sand.u32 %s114, 1
          %s259 = smul.addr %s258, 512
          %s260 = scalar_lea.vmem [#allocation7], %s259
          %s261 = smul.u32 8, %s20
          %s263 = ssub.s32 8192, 8192
          %264 = vsyncadd %s257, %s263
          %s265 = smul.addr %s261, 2
          %s266 = smul.addr %s19, 64
          %s267 = sadd.s32 %s265, %s266
          %s268 = smul.addr %s267, 128
          %s269 = scalar_lea.hbm %s3, %s268
          %s270 = sshll.u32 %s260, 4
          %s271 = int_to_ptr.vmem [resolvable:$true] %s270
          %276 = dma.hbm_to_vmem [thread:$0]  %s269, 8192, %s271, %s257, 128, 128, 8
        $region32: #{blur_pooling_3d.1} parent=23 // pred_fallthru
          _
      $region24: #{blur_pooling_3d.1} parent=5 // pred_fallthru
        _
      %p277 = scmp.le.s32.totalorder 1, %s12
      %p278 = scmp.lt.s32.totalorder %s12, 3
      %p279 = pnand %p277, %p278
      %p280 = pneg %p279
      // Predicated region
      $region33: #{blur_pooling_3d.1} parent=5 // pred_check
        _
      $region34: #{blur_pooling_3d.1} parent=5 // pred_check_branch
        %282 = sbr.rel (%p279) target = $region36
      $region35: #{blur_pooling_3d.1} parent=5 // pred_region
        %s283 = ssub.s32 %s12, 1
        // Predicated region
        $region37: #{blur_pooling_3d.1} parent=35 // pred_check
          %p284 = pneg %p45
        $region38: #{blur_pooling_3d.1} parent=35 // pred_check_branch
          %286 = sbr.rel (%p284) target = $region40
        $region39: #{blur_pooling_3d.1} parent=35 // pred_region
          %287 = dma.done [#allocation3], 128
        $region40: #{blur_pooling_3d.1} parent=35 // pred_fallthru
          _
        // Predicated region
        $region41: #{blur_pooling_3d.1} parent=35 // pred_check
          %p288 = pneg %p66
        $region42: #{blur_pooling_3d.1} parent=35 // pred_check_branch
          %290 = sbr.rel (%p288) target = $region44
        $region43: #{blur_pooling_3d.1} parent=35 // pred_region
          %291 = dma.done [#allocation5], 256
        $region44: #{blur_pooling_3d.1} parent=35 // pred_fallthru
          _
        %s292 = sand.u32 %s17, 1
        %s293 = scalar_lea.sflag [#allocation3], %s292
        %s294 = sand.u32 %s89, 1
        %s295 = smul.addr %s294, 64
        %s296 = scalar_lea.vmem [#allocation6], %s295
        // Predicated region
        $region45: #{blur_pooling_3d.1} parent=35 // pred_check
          %p297 = pneg %p102
        $region46: #{blur_pooling_3d.1} parent=35 // pred_check_branch
          %299 = sbr.rel (%p297) target = $region48
        $region47: #{blur_pooling_3d.1} parent=35 // pred_region
          %300 = dma.done %s293, 1024
        $region48: #{blur_pooling_3d.1} parent=35 // pred_fallthru
          _
        %s301 = sand.u32 %s17, 1
        %s302 = scalar_lea.sflag [#allocation3], %s301
        %s303 = sand.u32 %s117, 1
        %s304 = smul.addr %s303, 512
        %s305 = scalar_lea.vmem [#allocation7], %s304
        // Predicated region
        $region49: #{blur_pooling_3d.1} parent=35 // pred_check
          %p306 = pneg %p130
        $region50: #{blur_pooling_3d.1} parent=35 // pred_check_branch
          %308 = sbr.rel (%p306) target = $region52
        $region51: #{blur_pooling_3d.1} parent=35 // pred_region
          %309 = dma.done %s302, 8192
        $region52: #{blur_pooling_3d.1} parent=35 // pred_fallthru
          _
        %p310 = pneg %p45
        %p311 = pneg %p42
        %p312 = pneg %p66
        %p313 = pneg %p63
        %s314 = sand.u32 %s17, 1
        %s315 = scalar_lea.sflag [#allocation3], %s314
        %s316 = sand.u32 %s89, 1
        %s317 = smul.addr %s316, 64
        %s318 = scalar_lea.vmem [#allocation6], %s317
        %p319 = pneg %p102
        %p320 = pneg %p99
        %s321 = sand.u32 %s17, 1
        %s322 = scalar_lea.sflag [#allocation3], %s321
        %s323 = sand.u32 %s117, 1
        %s324 = smul.addr %s323, 512
        %s325 = scalar_lea.vmem [#allocation7], %s324
        %p326 = pneg %p130
        %p327 = pneg %p127
        %p328 = pneg %p158
        %p329 = pneg %p155
        %p330 = scmp.lt.s32.totalorder %s21, 1
        %s331 = scalar_select %p330, %s21, 1
        %p332 = scmp.lt.s32.totalorder %s22, 0
        %s333 = scalar_select %p332, %s22, 0
        %s334 = sadd.s32 %s333, %s331
        %s335 = smul.addr %s334, 8
        %s336 = scalar_lea.vmem %s4, %s335
        %s337 = smul.u32 %s22, 8
        %s338 = ssub.s32 %s337, 1
        %p339 = scmp.gt.s32.totalorder %s338, 0
        %s340 = scalar_select %p339, %s338, 0
        %s341 = smul.u32 8, %s22
        %p342 = scmp.lt.s32.totalorder %s21, 1
        %s343 = scalar_select %p342, %s21, 1
        %p344 = scmp.lt.s32.totalorder %s22, 0
        %s345 = scalar_select %p344, %s22, 0
        %s346 = sadd.s32 %s345, %s343
        %s347 = smul.addr %s346, 8
        %s348 = scalar_lea.vmem %s4, %s347
        %v349 = vld [vmem:[#allocation2] sm:$0xff]
        %v350 = vld [vmem:[#allocation4] sm:$0xff]
        %v351 = vld [vmem:[#allocation4 + $0x8] sm:$0xff]
        %v352 = vld [vmem:[%s305] sm:$0xff]
        %v353 = vld [vmem:[%s305 + $0x8] sm:$0xff]
        %v354 = vld [vmem:[%s305 + $0x10] sm:$0xff]
        %v355 = vld [vmem:[%s305 + $0x18] sm:$0xff]
        %v356 = vld [vmem:[%s305 + $0x20] sm:$0xff]
        %v357 = vld [vmem:[%s305 + $0x28] sm:$0xff]
        %v358 = vld [vmem:[%s305 + $0x30] sm:$0xff]
        %v359 = vld [vmem:[%s305 + $0x38] sm:$0xff]
        %v360 = vld [vmem:[%s305 + $0x40] sm:$0xff]
        %v361 = vld [vmem:[%s305 + $0x48] sm:$0xff]
        %v362 = vld [vmem:[%s305 + $0x50] sm:$0xff]
        %v363 = vld [vmem:[%s305 + $0x58] sm:$0xff]
        %v364 = vld [vmem:[%s305 + $0x60] sm:$0xff]
        %v365 = vld [vmem:[%s305 + $0x68] sm:$0xff]
        %v366 = vld [vmem:[%s305 + $0x70] sm:$0xff]
        %v367 = vld [vmem:[%s305 + $0x78] sm:$0xff]
        %v368 = vld [vmem:[%s305 + $0x80] sm:$0xff]
        %v369 = vld [vmem:[%s305 + $0x88] sm:$0xff]
        %v370 = vld [vmem:[%s305 + $0x90] sm:$0xff]
        %v371 = vld [vmem:[%s305 + $0x98] sm:$0xff]
        %v372 = vld [vmem:[%s305 + $0xa0] sm:$0xff]
        %v373 = vld [vmem:[%s305 + $0xa8] sm:$0xff]
        %v374 = vld [vmem:[%s305 + $0xb0] sm:$0xff]
        %v375 = vld [vmem:[%s305 + $0xb8] sm:$0xff]
        %v376 = vld [vmem:[%s305 + $0xc0] sm:$0xff]
        %v377 = vld [vmem:[%s305 + $0xc8] sm:$0xff]
        %v378 = vld [vmem:[%s305 + $0xd0] sm:$0xff]
        %v379 = vld [vmem:[%s305 + $0xd8] sm:$0xff]
        %v380 = vld [vmem:[%s305 + $0xe0] sm:$0xff]
        %v381 = vld [vmem:[%s305 + $0xe8] sm:$0xff]
        %v382 = vld [vmem:[%s305 + $0xf0] sm:$0xff]
        %v383 = vld [vmem:[%s305 + $0xf8] sm:$0xff]
        %v384 = vld [vmem:[%s305 + $0x100] sm:$0xff]
        %v385 = vld [vmem:[%s305 + $0x108] sm:$0xff]
        %v386 = vld [vmem:[%s305 + $0x110] sm:$0xff]
        %v387 = vld [vmem:[%s305 + $0x118] sm:$0xff]
        %v388 = vld [vmem:[%s305 + $0x120] sm:$0xff]
        %v389 = vld [vmem:[%s305 + $0x128] sm:$0xff]
        %v390 = vld [vmem:[%s305 + $0x130] sm:$0xff]
        %v391 = vld [vmem:[%s305 + $0x138] sm:$0xff]
        %v392 = vld [vmem:[%s305 + $0x140] sm:$0xff]
        %v393 = vld [vmem:[%s305 + $0x148] sm:$0xff]
        %v394 = vld [vmem:[%s305 + $0x150] sm:$0xff]
        %v395 = vld [vmem:[%s305 + $0x158] sm:$0xff]
        %v396 = vld [vmem:[%s305 + $0x160] sm:$0xff]
        %v397 = vld [vmem:[%s305 + $0x168] sm:$0xff]
        %v398 = vld [vmem:[%s305 + $0x170] sm:$0xff]
        %v399 = vld [vmem:[%s305 + $0x178] sm:$0xff]
        %v400 = vld [vmem:[%s305 + $0x180] sm:$0xff]
        %v401 = vld [vmem:[%s305 + $0x188] sm:$0xff]
        %v402 = vld [vmem:[%s305 + $0x190] sm:$0xff]
        %v403 = vld [vmem:[%s305 + $0x198] sm:$0xff]
        %v404 = vld [vmem:[%s305 + $0x1a0] sm:$0xff]
        %v405 = vld [vmem:[%s305 + $0x1a8] sm:$0xff]
        %v406 = vld [vmem:[%s305 + $0x1b0] sm:$0xff]
        %v407 = vld [vmem:[%s305 + $0x1b8] sm:$0xff]
        %v408 = vld [vmem:[%s305 + $0x1c0] sm:$0xff]
        %v409 = vld [vmem:[%s305 + $0x1c8] sm:$0xff]
        %v410 = vld [vmem:[%s305 + $0x1d0] sm:$0xff]
        %v411 = vld [vmem:[%s305 + $0x1d8] sm:$0xff]
        %v412 = vld [vmem:[%s305 + $0x1e0] sm:$0xff]
        %v413 = vld [vmem:[%s305 + $0x1e8] sm:$0xff]
        %v414 = vld [vmem:[%s305 + $0x1f0] sm:$0xff]
        %v415 = vld [vmem:[%s305 + $0x1f8] sm:$0xff]
        %vm416 = vcmask 130048
        %v417 = vsel %vm416, %v352, 0.0
        %v418 = vsel %vm416, %v368, 0.0
        %v419 = vadd.f32 %v417, %v418
        %v420 = vsel %vm416, %v384, 0.0
        %v421 = vadd.f32 %v419, %v420
        %v422 = vsel %vm416, %v400, 0.0
        %v423 = vadd.f32 %v421, %v422
        %v424 = vsel %vm416, %v353, 0.0
        %v425 = vsel %vm416, %v369, 0.0
        %v426 = vadd.f32 %v424, %v425
        %v427 = vsel %vm416, %v385, 0.0
        %v428 = vadd.f32 %v426, %v427
        %v429 = vsel %vm416, %v401, 0.0
        %v430 = vadd.f32 %v428, %v429
        %v431 = vsel %vm416, %v354, 0.0
        %v432 = vsel %vm416, %v370, 0.0
        %v433 = vadd.f32 %v431, %v432
        %v434 = vsel %vm416, %v386, 0.0
        %v435 = vadd.f32 %v433, %v434
        %v436 = vsel %vm416, %v402, 0.0
        %v437 = vadd.f32 %v435, %v436
        %v438 = vsel %vm416, %v355, 0.0
        %v439 = vsel %vm416, %v371, 0.0
        %v440 = vadd.f32 %v438, %v439
        %v441 = vsel %vm416, %v387, 0.0
        %v442 = vadd.f32 %v440, %v441
        %v443 = vsel %vm416, %v403, 0.0
        %v444 = vadd.f32 %v442, %v443
        %v445 = vsel %vm416, %v356, 0.0
        %v446 = vsel %vm416, %v372, 0.0
        %v447 = vadd.f32 %v445, %v446
        %v448 = vsel %vm416, %v388, 0.0
        %v449 = vadd.f32 %v447, %v448
        %v450 = vsel %vm416, %v404, 0.0
        %v451 = vadd.f32 %v449, %v450
        %v452 = vsel %vm416, %v357, 0.0
        %v453 = vsel %vm416, %v373, 0.0
        %v454 = vadd.f32 %v452, %v453
        %v455 = vsel %vm416, %v389, 0.0
        %v456 = vadd.f32 %v454, %v455
        %v457 = vsel %vm416, %v405, 0.0
        %v458 = vadd.f32 %v456, %v457
        %v459 = vsel %vm416, %v358, 0.0
        %v460 = vsel %vm416, %v374, 0.0
        %v461 = vadd.f32 %v459, %v460
        %v462 = vsel %vm416, %v390, 0.0
        %v463 = vadd.f32 %v461, %v462
        %v464 = vsel %vm416, %v406, 0.0
        %v465 = vadd.f32 %v463, %v464
        %v466 = vsel %vm416, %v359, 0.0
        %v467 = vsel %vm416, %v375, 0.0
        %v468 = vadd.f32 %v466, %v467
        %v469 = vsel %vm416, %v391, 0.0
        %v470 = vadd.f32 %v468, %v469
        %v471 = vsel %vm416, %v407, 0.0
        %v472 = vadd.f32 %v470, %v471
        %v473 = vsel %vm416, %v360, 0.0
        %v474 = vsel %vm416, %v376, 0.0
        %v475 = vadd.f32 %v473, %v474
        %v476 = vsel %vm416, %v392, 0.0
        %v477 = vadd.f32 %v475, %v476
        %v478 = vsel %vm416, %v408, 0.0
        %v479 = vadd.f32 %v477, %v478
        %v480 = vsel %vm416, %v361, 0.0
        %v481 = vsel %vm416, %v377, 0.0
        %v482 = vadd.f32 %v480, %v481
        %v483 = vsel %vm416, %v393, 0.0
        %v484 = vadd.f32 %v482, %v483
        %v485 = vsel %vm416, %v409, 0.0
        %v486 = vadd.f32 %v484, %v485
        %v487 = vsel %vm416, %v362, 0.0
        %v488 = vsel %vm416, %v378, 0.0
        %v489 = vadd.f32 %v487, %v488
        %v490 = vsel %vm416, %v394, 0.0
        %v491 = vadd.f32 %v489, %v490
        %v492 = vsel %vm416, %v410, 0.0
        %v493 = vadd.f32 %v491, %v492
        %v494 = vsel %vm416, %v363, 0.0
        %v495 = vsel %vm416, %v379, 0.0
        %v496 = vadd.f32 %v494, %v495
        %v497 = vsel %vm416, %v395, 0.0
        %v498 = vadd.f32 %v496, %v497
        %v499 = vsel %vm416, %v411, 0.0
        %v500 = vadd.f32 %v498, %v499
        %v501 = vsel %vm416, %v364, 0.0
        %v502 = vsel %vm416, %v380, 0.0
        %v503 = vadd.f32 %v501, %v502
        %v504 = vsel %vm416, %v396, 0.0
        %v505 = vadd.f32 %v503, %v504
        %v506 = vsel %vm416, %v412, 0.0
        %v507 = vadd.f32 %v505, %v506
        %v508 = vsel %vm416, %v365, 0.0
        %v509 = vsel %vm416, %v381, 0.0
        %v510 = vadd.f32 %v508, %v509
        %v511 = vsel %vm416, %v397, 0.0
        %v512 = vadd.f32 %v510, %v511
        %v513 = vsel %vm416, %v413, 0.0
        %v514 = vadd.f32 %v512, %v513
        %v515 = vsel %vm416, %v366, 0.0
        %v516 = vsel %vm416, %v382, 0.0
        %v517 = vadd.f32 %v515, %v516
        %v518 = vsel %vm416, %v398, 0.0
        %v519 = vadd.f32 %v517, %v518
        %v520 = vsel %vm416, %v414, 0.0
        %v521 = vadd.f32 %v519, %v520
        %v522 = vsel %vm416, %v367, 0.0
        %v523 = vsel %vm416, %v383, 0.0
        %v524 = vadd.f32 %v522, %v523
        %v525 = vsel %vm416, %v399, 0.0
        %v526 = vadd.f32 %v524, %v525
        %v527 = vsel %vm416, %v415, 0.0
        %v528 = vadd.f32 %v526, %v527
        %v529 = vld [vmem:[%s296] sm:$0xff]
        %v530 = vld [vmem:[%s296 + $0x8] sm:$0xff]
        %v531 = vld [vmem:[%s296 + $0x10] sm:$0xff]
        %v532 = vld [vmem:[%s296 + $0x18] sm:$0xff]
        %v533 = vld [vmem:[%s296 + $0x20] sm:$0xff]
        %v534 = vld [vmem:[%s296 + $0x28] sm:$0xff]
        %v535 = vld [vmem:[%s296 + $0x30] sm:$0xff]
        %v536 = vld [vmem:[%s296 + $0x38] sm:$0xff]
        %v537 = vsel %vm416, %v529, 0.0
        %v538 = vsel %vm416, %v531, 0.0
        %v539 = vadd.f32 %v537, %v538
        %v540 = vsel %vm416, %v533, 0.0
        %v541 = vadd.f32 %v539, %v540
        %v542 = vsel %vm416, %v535, 0.0
        %v543 = vadd.f32 %v541, %v542
        %v544 = vsel %vm416, %v530, 0.0
        %v545 = vsel %vm416, %v532, 0.0
        %v546 = vadd.f32 %v544, %v545
        %v547 = vsel %vm416, %v534, 0.0
        %v548 = vadd.f32 %v546, %v547
        %v549 = vsel %vm416, %v536, 0.0
        %v550 = vadd.f32 %v548, %v549
        %p551 = scmp.eq.s32.totalorder %s22, 0
        %s552 = scalar_select %p551, 0.0, 0.25
        %v553 = vstv %s552
        %v554 = vmul.f32 %v553, %v543
        %v555 = vmul.f32 %v553, %v550
        %v556 = vmul.f32 %v423, 0.5
        %v557 = vmul.f32 %v430, 0.5
        %v558 = vadd.f32 %v554, %v556
        %v559 = vadd.f32 %v555, %v557
        %v560 = vmul.f32 %v437, 0.25
        %v561 = vmul.f32 %v444, 0.25
        %v562 = vadd.f32 %v558, %v560
        %v563 = vadd.f32 %v559, %v561
        %v565 = vsel %vm416, %v349, 0
        %567 = vmatprep.subr.mxu0 0.0
        %568 = vmatpush1.msra.mxu0 %v562
        %569 = vmatprep.subr.mxu0 0.0
        %570 = vmatpush1.msra.mxu0 %v563
        %571 = vmatprep.subr.mxu0 0.0
        %572 = vmatpush1.msra.mxu0 0.0
        %573 = vmatprep.subr.mxu0 0.0
        %574 = vmatpush1.msra.mxu0 0.0
        %575 = vmatprep.subr.mxu0 0.0
        %576 = vmatpush1.msra.mxu0 0.0
        %577 = vmatprep.subr.mxu0 0.0
        %578 = vmatpush1.msra.mxu0 0.0
        %579 = vmatprep.subr.mxu0 0.0
        %580 = vmatpush1.msra.mxu0 0.0
        %581 = vmatprep.subr.mxu0 0.0
        %582 = vmatpush1.msra.mxu0 0.0
        %583 = vmatprep.subr.mxu0 0.0
        %584 = vmatpush1.msra.mxu0 0.0
        %585 = vmatprep.subr.mxu0 0.0
        %586 = vmatpush1.msra.mxu0 0.0
        %587 = vmatprep.subr.mxu0 0.0
        %588 = vmatpush1.msra.mxu0 0.0
        %589 = vmatprep.subr.mxu0 0.0
        %590 = vmatpush1.msra.mxu0 0.0
        %591 = vmatprep.subr.mxu0 0.0
        %592 = vmatpush1.msra.mxu0 0.0
        %593 = vmatprep.subr.mxu0 0.0
        %594 = vmatpush1.msra.mxu0 0.0
        %595 = vmatprep.subr.mxu0 0.0
        %596 = vmatpush1.msra.mxu0 0.0
        %597 = vmatprep.subr.mxu0 0.0
        %598 = vmatpush1.msra.mxu0 0.0
        %599 = vmatprep.subr.mxu0 0.0
        %600 = vmatpush1.msra.mxu0 0.0
        %601 = vmatprep.subr.mxu0 0.0
        %602 = vmatpush1.msra.mxu0 0.0
        %603 = vmatprep.subr.mxu0 0.0
        %604 = vmatpush1.msra.mxu0 0.0
        %605 = vmatprep.subr.mxu0 0.0
        %606 = vmatpush1.msra.mxu0 0.0
        %607 = vmatprep.subr.mxu0 0.0
        %608 = vmatpush1.msra.mxu0 0.0
        %609 = vmatprep.subr.mxu0 0.0
        %610 = vmatpush1.msra.mxu0 0.0
        %611 = vmatprep.subr.mxu0 0.0
        %612 = vmatpush1.msra.mxu0 0.0
        %613 = vmatprep.subr.mxu0 0.0
        %614 = vmatpush1.msra.mxu0 0.0
        %615 = vmatprep.subr.mxu0 0.0
        %616 = vmatpush1.msra.mxu0 0.0
        %617 = vmatprep.subr.mxu0 0.0
        %618 = vmatpush1.msra.mxu0 0.0
        %619 = vmatprep.subr.mxu0 0.0
        %620 = vmatpush1.msra.mxu0 0.0
        %621 = vmatprep.subr.mxu0 0.0
        %622 = vmatpush1.msra.mxu0 0.0
        %623 = vmatprep.subr.mxu0 0.0
        %624 = vmatpush1.msra.mxu0 0.0
        %625 = vmatprep.subr.mxu0 0.0
        %626 = vmatpush1.msra.mxu0 0.0
        %627 = vmatprep.subr.mxu0 0.0
        %628 = vmatpush1.msra.mxu0 0.0
        %629 = vmatprep.subr.mxu0 0.0
        %630 = vmatpush1.msra.mxu0 0.0
        %631 = vmatprep.mubr.f32.mxu0 0.0
        %632 = vmatmul.mubr.f32.gmra.mrb[0].mxu0 %v565
        %v633 = vpop.f32.mrb[0].mxu0
        %v634 = vadd.f32 0.0, %v633
        %v635 = vpop.f32.mrb[0].mxu0
        %636 = vdwg.mxu0
        %v638 = vsel %vm416, %v634, 0
        %640 = vmatprep.subr.mxu0 0.0
        %641 = vmatpush1.msra.mxu0 %v350
        %642 = vmatprep.subr.mxu0 0.0
        %643 = vmatpush1.msra.mxu0 %v351
        %644 = vmatprep.subr.mxu0 0.0
        %645 = vmatpush1.msra.mxu0 0.0
        %646 = vmatprep.subr.mxu0 0.0
        %647 = vmatpush1.msra.mxu0 0.0
        %648 = vmatprep.subr.mxu0 0.0
        %649 = vmatpush1.msra.mxu0 0.0
        %650 = vmatprep.subr.mxu0 0.0
        %651 = vmatpush1.msra.mxu0 0.0
        %652 = vmatprep.subr.mxu0 0.0
        %653 = vmatpush1.msra.mxu0 0.0
        %654 = vmatprep.subr.mxu0 0.0
        %655 = vmatpush1.msra.mxu0 0.0
        %656 = vmatprep.subr.mxu0 0.0
        %657 = vmatpush1.msra.mxu0 0.0
        %658 = vmatprep.subr.mxu0 0.0
        %659 = vmatpush1.msra.mxu0 0.0
        %660 = vmatprep.subr.mxu0 0.0
        %661 = vmatpush1.msra.mxu0 0.0
        %662 = vmatprep.subr.mxu0 0.0
        %663 = vmatpush1.msra.mxu0 0.0
        %664 = vmatprep.subr.mxu0 0.0
        %665 = vmatpush1.msra.mxu0 0.0
        %666 = vmatprep.subr.mxu0 0.0
        %667 = vmatpush1.msra.mxu0 0.0
        %668 = vmatprep.subr.mxu0 0.0
        %669 = vmatpush1.msra.mxu0 0.0
        %670 = vmatprep.subr.mxu0 0.0
        %671 = vmatpush1.msra.mxu0 0.0
        %672 = vmatprep.subr.mxu0 0.0
        %673 = vmatpush1.msra.mxu0 0.0
        %674 = vmatprep.subr.mxu0 0.0
        %675 = vmatpush1.msra.mxu0 0.0
        %676 = vmatprep.subr.mxu0 0.0
        %677 = vmatpush1.msra.mxu0 0.0
        %678 = vmatprep.subr.mxu0 0.0
        %679 = vmatpush1.msra.mxu0 0.0
        %680 = vmatprep.subr.mxu0 0.0
        %681 = vmatpush1.msra.mxu0 0.0
        %682 = vmatprep.subr.mxu0 0.0
        %683 = vmatpush1.msra.mxu0 0.0
        %684 = vmatprep.subr.mxu0 0.0
        %685 = vmatpush1.msra.mxu0 0.0
        %686 = vmatprep.subr.mxu0 0.0
        %687 = vmatpush1.msra.mxu0 0.0
        %688 = vmatprep.subr.mxu0 0.0
        %689 = vmatpush1.msra.mxu0 0.0
        %690 = vmatprep.subr.mxu0 0.0
        %691 = vmatpush1.msra.mxu0 0.0
        %692 = vmatprep.subr.mxu0 0.0
        %693 = vmatpush1.msra.mxu0 0.0
        %694 = vmatprep.subr.mxu0 0.0
        %695 = vmatpush1.msra.mxu0 0.0
        %696 = vmatprep.subr.mxu0 0.0
        %697 = vmatpush1.msra.mxu0 0.0
        %698 = vmatprep.subr.mxu0 0.0
        %699 = vmatpush1.msra.mxu0 0.0
        %700 = vmatprep.subr.mxu0 0.0
        %701 = vmatpush1.msra.mxu0 0.0
        %702 = vmatprep.subr.mxu0 0.0
        %703 = vmatpush1.msra.mxu0 0.0
        %704 = vmatprep.mubr.f32.mxu0 0.0
        %705 = vmatmul.mubr.f32.gmra.mrb[0].mxu0 %v638
        %v706 = vpop.f32.mrb[0].mxu0
        %v707 = vadd.f32 0.0, %v706
        %v708 = vpop.f32.mrb[0].mxu0
        %709 = vdwg.mxu0
        %vm710 = vcmask 64512
        %711 = vst.msk [vmem:[%s348] sm:$0xff] %vm710, %v707
        %v712 = vmul.f32 %v451, 0.5
        %v713 = vmul.f32 %v458, 0.5
        %v714 = vadd.f32 %v560, %v712
        %v715 = vadd.f32 %v561, %v713
        %v716 = vmul.f32 %v465, 0.25
        %v717 = vmul.f32 %v472, 0.25
        %v718 = vadd.f32 %v714, %v716
        %v719 = vadd.f32 %v715, %v717
        %720 = vmatprep.subr.mxu0 0.0
        %721 = vmatpush1.msra.mxu0 %v718
        %722 = vmatprep.subr.mxu0 0.0
        %723 = vmatpush1.msra.mxu0 %v719
        %724 = vmatprep.subr.mxu0 0.0
        %725 = vmatpush1.msra.mxu0 0.0
        %726 = vmatprep.subr.mxu0 0.0
        %727 = vmatpush1.msra.mxu0 0.0
        %728 = vmatprep.subr.mxu0 0.0
        %729 = vmatpush1.msra.mxu0 0.0
        %730 = vmatprep.subr.mxu0 0.0
        %731 = vmatpush1.msra.mxu0 0.0
        %732 = vmatprep.subr.mxu0 0.0
        %733 = vmatpush1.msra.mxu0 0.0
        %734 = vmatprep.subr.mxu0 0.0
        %735 = vmatpush1.msra.mxu0 0.0
        %736 = vmatprep.subr.mxu0 0.0
        %737 = vmatpush1.msra.mxu0 0.0
        %738 = vmatprep.subr.mxu0 0.0
        %739 = vmatpush1.msra.mxu0 0.0
        %740 = vmatprep.subr.mxu0 0.0
        %741 = vmatpush1.msra.mxu0 0.0
        %742 = vmatprep.subr.mxu0 0.0
        %743 = vmatpush1.msra.mxu0 0.0
        %744 = vmatprep.subr.mxu0 0.0
        %745 = vmatpush1.msra.mxu0 0.0
        %746 = vmatprep.subr.mxu0 0.0
        %747 = vmatpush1.msra.mxu0 0.0
        %748 = vmatprep.subr.mxu0 0.0
        %749 = vmatpush1.msra.mxu0 0.0
        %750 = vmatprep.subr.mxu0 0.0
        %751 = vmatpush1.msra.mxu0 0.0
        %752 = vmatprep.subr.mxu0 0.0
        %753 = vmatpush1.msra.mxu0 0.0
        %754 = vmatprep.subr.mxu0 0.0
        %755 = vmatpush1.msra.mxu0 0.0
        %756 = vmatprep.subr.mxu0 0.0
        %757 = vmatpush1.msra.mxu0 0.0
        %758 = vmatprep.subr.mxu0 0.0
        %759 = vmatpush1.msra.mxu0 0.0
        %760 = vmatprep.subr.mxu0 0.0
        %761 = vmatpush1.msra.mxu0 0.0
        %762 = vmatprep.subr.mxu0 0.0
        %763 = vmatpush1.msra.mxu0 0.0
        %764 = vmatprep.subr.mxu0 0.0
        %765 = vmatpush1.msra.mxu0 0.0
        %766 = vmatprep.subr.mxu0 0.0
        %767 = vmatpush1.msra.mxu0 0.0
        %768 = vmatprep.subr.mxu0 0.0
        %769 = vmatpush1.msra.mxu0 0.0
        %770 = vmatprep.subr.mxu0 0.0
        %771 = vmatpush1.msra.mxu0 0.0
        %772 = vmatprep.subr.mxu0 0.0
        %773 = vmatpush1.msra.mxu0 0.0
        %774 = vmatprep.subr.mxu0 0.0
        %775 = vmatpush1.msra.mxu0 0.0
        %776 = vmatprep.subr.mxu0 0.0
        %777 = vmatpush1.msra.mxu0 0.0
        %778 = vmatprep.subr.mxu0 0.0
        %779 = vmatpush1.msra.mxu0 0.0
        %780 = vmatprep.subr.mxu0 0.0
        %781 = vmatpush1.msra.mxu0 0.0
        %782 = vmatprep.subr.mxu0 0.0
        %783 = vmatpush1.msra.mxu0 0.0
        %784 = vmatprep.mubr.f32.mxu0 0.0
        %785 = vmatmul.mubr.f32.gmra.mrb[0].mxu0 %v565
        %v786 = vpop.f32.mrb[0].mxu0
        %v787 = vadd.f32 0.0, %v786
        %v788 = vpop.f32.mrb[0].mxu0
        %789 = vdwg.mxu0
        %v791 = vsel %vm416, %v787, 0
        %793 = vmatprep.subr.mxu0 0.0
        %794 = vmatpush1.msra.mxu0 %v350
        %795 = vmatprep.subr.mxu0 0.0
        %796 = vmatpush1.msra.mxu0 %v351
        %797 = vmatprep.subr.mxu0 0.0
        %798 = vmatpush1.msra.mxu0 0.0
        %799 = vmatprep.subr.mxu0 0.0
        %800 = vmatpush1.msra.mxu0 0.0
        %801 = vmatprep.subr.mxu0 0.0
        %802 = vmatpush1.msra.mxu0 0.0
        %803 = vmatprep.subr.mxu0 0.0
        %804 = vmatpush1.msra.mxu0 0.0
        %805 = vmatprep.subr.mxu0 0.0
        %806 = vmatpush1.msra.mxu0 0.0
        %807 = vmatprep.subr.mxu0 0.0
        %808 = vmatpush1.msra.mxu0 0.0
        %809 = vmatprep.subr.mxu0 0.0
        %810 = vmatpush1.msra.mxu0 0.0
        %811 = vmatprep.subr.mxu0 0.0
        %812 = vmatpush1.msra.mxu0 0.0
        %813 = vmatprep.subr.mxu0 0.0
        %814 = vmatpush1.msra.mxu0 0.0
        %815 = vmatprep.subr.mxu0 0.0
        %816 = vmatpush1.msra.mxu0 0.0
        %817 = vmatprep.subr.mxu0 0.0
        %818 = vmatpush1.msra.mxu0 0.0
        %819 = vmatprep.subr.mxu0 0.0
        %820 = vmatpush1.msra.mxu0 0.0
        %821 = vmatprep.subr.mxu0 0.0
        %822 = vmatpush1.msra.mxu0 0.0
        %823 = vmatprep.subr.mxu0 0.0
        %824 = vmatpush1.msra.mxu0 0.0
        %825 = vmatprep.subr.mxu0 0.0
        %826 = vmatpush1.msra.mxu0 0.0
        %827 = vmatprep.subr.mxu0 0.0
        %828 = vmatpush1.msra.mxu0 0.0
        %829 = vmatprep.subr.mxu0 0.0
        %830 = vmatpush1.msra.mxu0 0.0
        %831 = vmatprep.subr.mxu0 0.0
        %832 = vmatpush1.msra.mxu0 0.0
        %833 = vmatprep.subr.mxu0 0.0
        %834 = vmatpush1.msra.mxu0 0.0
        %835 = vmatprep.subr.mxu0 0.0
        %836 = vmatpush1.msra.mxu0 0.0
        %837 = vmatprep.subr.mxu0 0.0
        %838 = vmatpush1.msra.mxu0 0.0
        %839 = vmatprep.subr.mxu0 0.0
        %840 = vmatpush1.msra.mxu0 0.0
        %841 = vmatprep.subr.mxu0 0.0
        %842 = vmatpush1.msra.mxu0 0.0
        %843 = vmatprep.subr.mxu0 0.0
        %844 = vmatpush1.msra.mxu0 0.0
        %845 = vmatprep.subr.mxu0 0.0
        %846 = vmatpush1.msra.mxu0 0.0
        %847 = vmatprep.subr.mxu0 0.0
        %848 = vmatpush1.msra.mxu0 0.0
        %849 = vmatprep.subr.mxu0 0.0
        %850 = vmatpush1.msra.mxu0 0.0
        %851 = vmatprep.subr.mxu0 0.0
        %852 = vmatpush1.msra.mxu0 0.0
        %853 = vmatprep.subr.mxu0 0.0
        %854 = vmatpush1.msra.mxu0 0.0
        %855 = vmatprep.subr.mxu0 0.0
        %856 = vmatpush1.msra.mxu0 0.0
        %857 = vmatprep.mubr.f32.mxu0 0.0
        %858 = vmatmul.mubr.f32.gmra.mrb[0].mxu0 %v791
        %v859 = vpop.f32.mrb[0].mxu0
        %v860 = vadd.f32 0.0, %v859
        %v861 = vpop.f32.mrb[0].mxu0
        %862 = vdwg.mxu0
        %864 = vrot.lane.b32.xlu0 %v860, 8
        %v865 = vpop.permute.xlu0 %864
        %vm867 = vcmask 130112
        %868 = vst.msk [vmem:[%s348] sm:$0xff] %vm867, %v865
        %v869 = vmul.f32 %v479, 0.5
        %v870 = vmul.f32 %v486, 0.5
        %v871 = vadd.f32 %v716, %v869
        %v872 = vadd.f32 %v717, %v870
        %v873 = vmul.f32 %v493, 0.25
        %v874 = vmul.f32 %v500, 0.25
        %v875 = vadd.f32 %v871, %v873
        %v876 = vadd.f32 %v872, %v874
        %877 = vmatprep.subr.mxu0 0.0
        %878 = vmatpush1.msra.mxu0 %v875
        %879 = vmatprep.subr.mxu0 0.0
        %880 = vmatpush1.msra.mxu0 %v876
        %881 = vmatprep.subr.mxu0 0.0
        %882 = vmatpush1.msra.mxu0 0.0
        %883 = vmatprep.subr.mxu0 0.0
        %884 = vmatpush1.msra.mxu0 0.0
        %885 = vmatprep.subr.mxu0 0.0
        %886 = vmatpush1.msra.mxu0 0.0
        %887 = vmatprep.subr.mxu0 0.0
        %888 = vmatpush1.msra.mxu0 0.0
        %889 = vmatprep.subr.mxu0 0.0
        %890 = vmatpush1.msra.mxu0 0.0
        %891 = vmatprep.subr.mxu0 0.0
        %892 = vmatpush1.msra.mxu0 0.0
        %893 = vmatprep.subr.mxu0 0.0
        %894 = vmatpush1.msra.mxu0 0.0
        %895 = vmatprep.subr.mxu0 0.0
        %896 = vmatpush1.msra.mxu0 0.0
        %897 = vmatprep.subr.mxu0 0.0
        %898 = vmatpush1.msra.mxu0 0.0
        %899 = vmatprep.subr.mxu0 0.0
        %900 = vmatpush1.msra.mxu0 0.0
        %901 = vmatprep.subr.mxu0 0.0
        %902 = vmatpush1.msra.mxu0 0.0
        %903 = vmatprep.subr.mxu0 0.0
        %904 = vmatpush1.msra.mxu0 0.0
        %905 = vmatprep.subr.mxu0 0.0
        %906 = vmatpush1.msra.mxu0 0.0
        %907 = vmatprep.subr.mxu0 0.0
        %908 = vmatpush1.msra.mxu0 0.0
        %909 = vmatprep.subr.mxu0 0.0
        %910 = vmatpush1.msra.mxu0 0.0
        %911 = vmatprep.subr.mxu0 0.0
        %912 = vmatpush1.msra.mxu0 0.0
        %913 = vmatprep.subr.mxu0 0.0
        %914 = vmatpush1.msra.mxu0 0.0
        %915 = vmatprep.subr.mxu0 0.0
        %916 = vmatpush1.msra.mxu0 0.0
        %917 = vmatprep.subr.mxu0 0.0
        %918 = vmatpush1.msra.mxu0 0.0
        %919 = vmatprep.subr.mxu0 0.0
        %920 = vmatpush1.msra.mxu0 0.0
        %921 = vmatprep.subr.mxu0 0.0
        %922 = vmatpush1.msra.mxu0 0.0
        %923 = vmatprep.subr.mxu0 0.0
        %924 = vmatpush1.msra.mxu0 0.0
        %925 = vmatprep.subr.mxu0 0.0
        %926 = vmatpush1.msra.mxu0 0.0
        %927 = vmatprep.subr.mxu0 0.0
        %928 = vmatpush1.msra.mxu0 0.0
        %929 = vmatprep.subr.mxu0 0.0
        %930 = vmatpush1.msra.mxu0 0.0
        %931 = vmatprep.subr.mxu0 0.0
        %932 = vmatpush1.msra.mxu0 0.0
        %933 = vmatprep.subr.mxu0 0.0
        %934 = vmatpush1.msra.mxu0 0.0
        %935 = vmatprep.subr.mxu0 0.0
        %936 = vmatpush1.msra.mxu0 0.0
        %937 = vmatprep.subr.mxu0 0.0
        %938 = vmatpush1.msra.mxu0 0.0
        %939 = vmatprep.subr.mxu0 0.0
        %940 = vmatpush1.msra.mxu0 0.0
        %941 = vmatprep.mubr.f32.mxu0 0.0
        %942 = vmatmul.mubr.f32.gmra.mrb[0].mxu0 %v565
        %v943 = vpop.f32.mrb[0].mxu0
        %v944 = vadd.f32 0.0, %v943
        %v945 = vpop.f32.mrb[0].mxu0
        %946 = vdwg.mxu0
        %v948 = vsel %vm416, %v944, 0
        %950 = vmatprep.subr.mxu0 0.0
        %951 = vmatpush1.msra.mxu0 %v350
        %952 = vmatprep.subr.mxu0 0.0
        %953 = vmatpush1.msra.mxu0 %v351
        %954 = vmatprep.subr.mxu0 0.0
        %955 = vmatpush1.msra.mxu0 0.0
        %956 = vmatprep.subr.mxu0 0.0
        %957 = vmatpush1.msra.mxu0 0.0
        %958 = vmatprep.subr.mxu0 0.0
        %959 = vmatpush1.msra.mxu0 0.0
        %960 = vmatprep.subr.mxu0 0.0
        %961 = vmatpush1.msra.mxu0 0.0
        %962 = vmatprep.subr.mxu0 0.0
        %963 = vmatpush1.msra.mxu0 0.0
        %964 = vmatprep.subr.mxu0 0.0
        %965 = vmatpush1.msra.mxu0 0.0
        %966 = vmatprep.subr.mxu0 0.0
        %967 = vmatpush1.msra.mxu0 0.0
        %968 = vmatprep.subr.mxu0 0.0
        %969 = vmatpush1.msra.mxu0 0.0
        %970 = vmatprep.subr.mxu0 0.0
        %971 = vmatpush1.msra.mxu0 0.0
        %972 = vmatprep.subr.mxu0 0.0
        %973 = vmatpush1.msra.mxu0 0.0
        %974 = vmatprep.subr.mxu0 0.0
        %975 = vmatpush1.msra.mxu0 0.0
        %976 = vmatprep.subr.mxu0 0.0
        %977 = vmatpush1.msra.mxu0 0.0
        %978 = vmatprep.subr.mxu0 0.0
        %979 = vmatpush1.msra.mxu0 0.0
        %980 = vmatprep.subr.mxu0 0.0
        %981 = vmatpush1.msra.mxu0 0.0
        %982 = vmatprep.subr.mxu0 0.0
        %983 = vmatpush1.msra.mxu0 0.0
        %984 = vmatprep.subr.mxu0 0.0
        %985 = vmatpush1.msra.mxu0 0.0
        %986 = vmatprep.subr.mxu0 0.0
        %987 = vmatpush1.msra.mxu0 0.0
        %988 = vmatprep.subr.mxu0 0.0
        %989 = vmatpush1.msra.mxu0 0.0
        %990 = vmatprep.subr.mxu0 0.0
        %991 = vmatpush1.msra.mxu0 0.0
        %992 = vmatprep.subr.mxu0 0.0
        %993 = vmatpush1.msra.mxu0 0.0
        %994 = vmatprep.subr.mxu0 0.0
        %995 = vmatpush1.msra.mxu0 0.0
        %996 = vmatprep.subr.mxu0 0.0
        %997 = vmatpush1.msra.mxu0 0.0
        %998 = vmatprep.subr.mxu0 0.0
        %999 = vmatpush1.msra.mxu0 0.0
        %1000 = vmatprep.subr.mxu0 0.0
        %1001 = vmatpush1.msra.mxu0 0.0
        %1002 = vmatprep.subr.mxu0 0.0
        %1003 = vmatpush1.msra.mxu0 0.0
        %1004 = vmatprep.subr.mxu0 0.0
        %1005 = vmatpush1.msra.mxu0 0.0
        %1006 = vmatprep.subr.mxu0 0.0
        %1007 = vmatpush1.msra.mxu0 0.0
        %1008 = vmatprep.subr.mxu0 0.0
        %1009 = vmatpush1.msra.mxu0 0.0
        %1010 = vmatprep.subr.mxu0 0.0
        %1011 = vmatpush1.msra.mxu0 0.0
        %1012 = vmatprep.subr.mxu0 0.0
        %1013 = vmatpush1.msra.mxu0 0.0
        %1014 = vmatprep.mubr.f32.mxu0 0.0
        %1015 = vmatmul.mubr.f32.gmra.mrb[0].mxu0 %v948
        %v1016 = vpop.f32.mrb[0].mxu0
        %v1017 = vadd.f32 0.0, %v1016
        %v1018 = vpop.f32.mrb[0].mxu0
        %1019 = vdwg.mxu0
        %1021 = vrot.lane.b32.xlu0 %v1017, 16
        %v1022 = vpop.permute.xlu0 %1021
        %vm1024 = vcmask 195712
        %1025 = vst.msk [vmem:[%s348] sm:$0xff] %vm1024, %v1022
        %v1026 = vmul.f32 %v507, 0.5
        %v1027 = vmul.f32 %v514, 0.5
        %v1028 = vadd.f32 %v873, %v1026
        %v1029 = vadd.f32 %v874, %v1027
        %v1030 = vmul.f32 %v521, 0.25
        %v1031 = vmul.f32 %v528, 0.25
        %v1032 = vadd.f32 %v1028, %v1030
        %v1033 = vadd.f32 %v1029, %v1031
        %1034 = vmatprep.subr.mxu0 0.0
        %1035 = vmatpush1.msra.mxu0 %v1032
        %1036 = vmatprep.subr.mxu0 0.0
        %1037 = vmatpush1.msra.mxu0 %v1033
        %1038 = vmatprep.subr.mxu0 0.0
        %1039 = vmatpush1.msra.mxu0 0.0
        %1040 = vmatprep.subr.mxu0 0.0
        %1041 = vmatpush1.msra.mxu0 0.0
        %1042 = vmatprep.subr.mxu0 0.0
        %1043 = vmatpush1.msra.mxu0 0.0
        %1044 = vmatprep.subr.mxu0 0.0
        %1045 = vmatpush1.msra.mxu0 0.0
        %1046 = vmatprep.subr.mxu0 0.0
        %1047 = vmatpush1.msra.mxu0 0.0
        %1048 = vmatprep.subr.mxu0 0.0
        %1049 = vmatpush1.msra.mxu0 0.0
        %1050 = vmatprep.subr.mxu0 0.0
        %1051 = vmatpush1.msra.mxu0 0.0
        %1052 = vmatprep.subr.mxu0 0.0
        %1053 = vmatpush1.msra.mxu0 0.0
        %1054 = vmatprep.subr.mxu0 0.0
        %1055 = vmatpush1.msra.mxu0 0.0
        %1056 = vmatprep.subr.mxu0 0.0
        %1057 = vmatpush1.msra.mxu0 0.0
        %1058 = vmatprep.subr.mxu0 0.0
        %1059 = vmatpush1.msra.mxu0 0.0
        %1060 = vmatprep.subr.mxu0 0.0
        %1061 = vmatpush1.msra.mxu0 0.0
        %1062 = vmatprep.subr.mxu0 0.0
        %1063 = vmatpush1.msra.mxu0 0.0
        %1064 = vmatprep.subr.mxu0 0.0
        %1065 = vmatpush1.msra.mxu0 0.0
        %1066 = vmatprep.subr.mxu0 0.0
        %1067 = vmatpush1.msra.mxu0 0.0
        %1068 = vmatprep.subr.mxu0 0.0
        %1069 = vmatpush1.msra.mxu0 0.0
        %1070 = vmatprep.subr.mxu0 0.0
        %1071 = vmatpush1.msra.mxu0 0.0
        %1072 = vmatprep.subr.mxu0 0.0
        %1073 = vmatpush1.msra.mxu0 0.0
        %1074 = vmatprep.subr.mxu0 0.0
        %1075 = vmatpush1.msra.mxu0 0.0
        %1076 = vmatprep.subr.mxu0 0.0
        %1077 = vmatpush1.msra.mxu0 0.0
        %1078 = vmatprep.subr.mxu0 0.0
        %1079 = vmatpush1.msra.mxu0 0.0
        %1080 = vmatprep.subr.mxu0 0.0
        %1081 = vmatpush1.msra.mxu0 0.0
        %1082 = vmatprep.subr.mxu0 0.0
        %1083 = vmatpush1.msra.mxu0 0.0
        %1084 = vmatprep.subr.mxu0 0.0
        %1085 = vmatpush1.msra.mxu0 0.0
        %1086 = vmatprep.subr.mxu0 0.0
        %1087 = vmatpush1.msra.mxu0 0.0
        %1088 = vmatprep.subr.mxu0 0.0
        %1089 = vmatpush1.msra.mxu0 0.0
        %1090 = vmatprep.subr.mxu0 0.0
        %1091 = vmatpush1.msra.mxu0 0.0
        %1092 = vmatprep.subr.mxu0 0.0
        %1093 = vmatpush1.msra.mxu0 0.0
        %1094 = vmatprep.subr.mxu0 0.0
        %1095 = vmatpush1.msra.mxu0 0.0
        %1096 = vmatprep.subr.mxu0 0.0
        %1097 = vmatpush1.msra.mxu0 0.0
        %1098 = vmatprep.mubr.f32.mxu0 0.0
        %1099 = vmatmul.mubr.f32.gmra.mrb[0].mxu0 %v565
        %v1100 = vpop.f32.mrb[0].mxu0
        %v1101 = vadd.f32 0.0, %v1100
        %v1102 = vpop.f32.mrb[0].mxu0
        %1103 = vdwg.mxu0
        %v1105 = vsel %vm416, %v1101, 0
        %1107 = vmatprep.subr.mxu0 0.0
        %1108 = vmatpush1.msra.mxu0 %v350
        %1109 = vmatprep.subr.mxu0 0.0
        %1110 = vmatpush1.msra.mxu0 %v351
        %1111 = vmatprep.subr.mxu0 0.0
        %1112 = vmatpush1.msra.mxu0 0.0
        %1113 = vmatprep.subr.mxu0 0.0
        %1114 = vmatpush1.msra.mxu0 0.0
        %1115 = vmatprep.subr.mxu0 0.0
        %1116 = vmatpush1.msra.mxu0 0.0
        %1117 = vmatprep.subr.mxu0 0.0
        %1118 = vmatpush1.msra.mxu0 0.0
        %1119 = vmatprep.subr.mxu0 0.0
        %1120 = vmatpush1.msra.mxu0 0.0
        %1121 = vmatprep.subr.mxu0 0.0
        %1122 = vmatpush1.msra.mxu0 0.0
        %1123 = vmatprep.subr.mxu0 0.0
        %1124 = vmatpush1.msra.mxu0 0.0
        %1125 = vmatprep.subr.mxu0 0.0
        %1126 = vmatpush1.msra.mxu0 0.0
        %1127 = vmatprep.subr.mxu0 0.0
        %1128 = vmatpush1.msra.mxu0 0.0
        %1129 = vmatprep.subr.mxu0 0.0
        %1130 = vmatpush1.msra.mxu0 0.0
        %1131 = vmatprep.subr.mxu0 0.0
        %1132 = vmatpush1.msra.mxu0 0.0
        %1133 = vmatprep.subr.mxu0 0.0
        %1134 = vmatpush1.msra.mxu0 0.0
        %1135 = vmatprep.subr.mxu0 0.0
        %1136 = vmatpush1.msra.mxu0 0.0
        %1137 = vmatprep.subr.mxu0 0.0
        %1138 = vmatpush1.msra.mxu0 0.0
        %1139 = vmatprep.subr.mxu0 0.0
        %1140 = vmatpush1.msra.mxu0 0.0
        %1141 = vmatprep.subr.mxu0 0.0
        %1142 = vmatpush1.msra.mxu0 0.0
        %1143 = vmatprep.subr.mxu0 0.0
        %1144 = vmatpush1.msra.mxu0 0.0
        %1145 = vmatprep.subr.mxu0 0.0
        %1146 = vmatpush1.msra.mxu0 0.0
        %1147 = vmatprep.subr.mxu0 0.0
        %1148 = vmatpush1.msra.mxu0 0.0
        %1149 = vmatprep.subr.mxu0 0.0
        %1150 = vmatpush1.msra.mxu0 0.0
        %1151 = vmatprep.subr.mxu0 0.0
        %1152 = vmatpush1.msra.mxu0 0.0
        %1153 = vmatprep.subr.mxu0 0.0
        %1154 = vmatpush1.msra.mxu0 0.0
        %1155 = vmatprep.subr.mxu0 0.0
        %1156 = vmatpush1.msra.mxu0 0.0
        %1157 = vmatprep.subr.mxu0 0.0
        %1158 = vmatpush1.msra.mxu0 0.0
        %1159 = vmatprep.subr.mxu0 0.0
        %1160 = vmatpush1.msra.mxu0 0.0
        %1161 = vmatprep.subr.mxu0 0.0
        %1162 = vmatpush1.msra.mxu0 0.0
        %1163 = vmatprep.subr.mxu0 0.0
        %1164 = vmatpush1.msra.mxu0 0.0
        %1165 = vmatprep.subr.mxu0 0.0
        %1166 = vmatpush1.msra.mxu0 0.0
        %1167 = vmatprep.subr.mxu0 0.0
        %1168 = vmatpush1.msra.mxu0 0.0
        %1169 = vmatprep.subr.mxu0 0.0
        %1170 = vmatpush1.msra.mxu0 0.0
        %1171 = vmatprep.mubr.f32.mxu0 0.0
        %1172 = vmatmul.mubr.f32.gmra.mrb[0].mxu0 %v1105
        %v1173 = vpop.f32.mrb[0].mxu0
        %v1174 = vadd.f32 0.0, %v1173
        %v1175 = vpop.f32.mrb[0].mxu0
        %1176 = vdwg.mxu0
        %1178 = vrot.lane.b32.xlu0 %v1174, 24
        %v1179 = vpop.permute.xlu0 %1178
        %vm1181 = vcmask 261312
        %1182 = vst.msk [vmem:[%s348] sm:$0xff] %vm1181, %v1179
        %p1183 = scmp.lt.s32.totalorder %s21, 1
        %s1184 = scalar_select %p1183, %s21, 1
        %p1185 = scmp.lt.s32.totalorder %s22, 0
        %s1186 = scalar_select %p1185, %s22, 0
        %s1187 = sadd.s32 %s1186, %s1184
        %s1188 = smul.addr %s1187, 8
        %s1189 = scalar_lea.vmem %s4, %s1188
        // Predicated region
        $region53: #{blur_pooling_3d.1} parent=35 // pred_check
          %p1190 = pneg %p155
        $region54: #{blur_pooling_3d.1} parent=35 // pred_check_branch
          %1192 = sbr.rel (%p1190) target = $region56
        $region55: #{blur_pooling_3d.1} parent=35 // pred_region
          _
        $region56: #{blur_pooling_3d.1} parent=35 // pred_fallthru
          _
      $region36: #{blur_pooling_3d.1} parent=5 // pred_fallthru
        _
      %p1193 = scmp.le.s32.totalorder 2, %s12
      // Predicated region
      $region57: #{blur_pooling_3d.1} parent=5 // pred_check
        %p1194 = pneg %p1193
      $region58: #{blur_pooling_3d.1} parent=5 // pred_check_branch
        %1196 = sbr.rel (%p1194) target = $region60
      $region59: #{blur_pooling_3d.1} parent=5 // pred_region
        %s1197 = ssub.s32 %s12, 2
        // Predicated region
        $region61: #{blur_pooling_3d.1} parent=59 // pred_check
          %p1198 = pneg %p161
        $region62: #{blur_pooling_3d.1} parent=59 // pred_check_branch
          %1200 = sbr.rel (%p1198) target = $region64
        $region63: #{blur_pooling_3d.1} parent=59 // pred_region
          %p1201 = scmp.lt.s32.totalorder %s23, 1
          %s1202 = scalar_select %p1201, %s23, 1
          %p1203 = scmp.lt.s32.totalorder %s24, 0
          %s1204 = scalar_select %p1203, %s24, 0
          %s1205 = sadd.s32 %s1204, %s1202
          %s1206 = smul.addr %s1205, 8
          %s1207 = scalar_lea.vmem %s4, %s1206
        $region64: #{blur_pooling_3d.1} parent=59 // pred_fallthru
          _
      $region60: #{blur_pooling_3d.1} parent=5 // pred_fallthru
        _
    $region6: #{blur_pooling_3d.1} parent=1 // loop_footer
      %s16 = sadd.s32 1, %s12
    $region7: #{blur_pooling_3d.1} parent=1 // loop_footer_branch
      %11 = sbr.rel target = $region3
    $region8: #{blur_pooling_3d.1} parent=1 // loop_exit
      _
    %1208 = vsyncpa [#allocation3], 1
    %s1209 = scalar_lea.sflag [#allocation3], 1
    %1210 = vsyncpa %s1209, 1
    %1211 = vsyncpa [#allocation5], 1

</llo_original>
